<compile_context>
chip_gen: v7x
topology: tpu7x:2x2x1
jax: 0.10.0
libtpu: 0.0.40
codegen_flags: <defaults>
</compile_context>

<pallas_src>
import functools

import jax
import jax.numpy as jnp
from jax import lax
from jax.experimental import pallas as pl
from jax.experimental.pallas import tpu as pltpu

_MASK24 = (1 << 24) - 1


def _round_up(a, m):
    return ((a + m - 1) // m) * m


def _count_and_store(bits_i32, out_ref, *, n_draws, thr):
    """Shared compare + reduce. bits_i32: (c_pad, tb) raw int32 random bits."""
    c_pad = bits_i32.shape[0]
    # Uniform integer in [0, 2^24) per element.
    u24 = jnp.bitwise_and(bits_i32, jnp.int32(_MASK24))
    # Per-row threshold column: THR for the real n+1 draws, 0 for padded rows
    # (u24 >= 0 so padded rows never fire).  Folds the pad mask into the single
    # integer compare -> no logical_and / select per element.
    row = lax.broadcasted_iota(jnp.int32, (c_pad, 1), 0)
    thr_col = jnp.where(row < n_draws, jnp.int32(thr), jnp.int32(0))
    g = (u24 < thr_col).astype(jnp.int32)            # Bernoulli(1-p) draws
    # Sublane reduce -> one count per batch lane; cast only at the store.
    out_ref[...] = jnp.sum(g, axis=0, keepdims=True).astype(out_ref.dtype)


def _prng_kernel(seed_ref, out_ref, *, n_draws, c_pad, tb, thr):
    # Two-word seed (user seed, tile id): deterministic, no cross-seed collisions.
    pltpu.prng_seed(seed_ref[0], pl.program_id(0))
    bits = pltpu.bitcast(pltpu.prng_random_bits((c_pad, tb)), jnp.int32)
    _count_and_store(bits, out_ref, n_draws=n_draws, thr=thr)


def _bits_kernel(bits_ref, out_ref, *, n_draws, thr):
    _count_and_store(bits_ref[...], out_ref, n_draws=n_draws, thr=thr)


def binomial_count(x, n, p, seed=0, *, block_batch=2048):
    """Per-row Binomial(n+1, 1-p) count; x supplies only batch size & dtype."""
    batch = x.shape[0]
    dtype = x.dtype

    n_draws = n + 1
    c_pad = max(8, _round_up(n_draws, 8))             # sublane-aligned draw rows

    # Lane tile: large enough to amortize grid-step overhead, small enough that
    # the (c_pad, tb) int32 bits slab (+ temporaries) stays ~<= 2 MiB (safe on
    # v7x 64 MiB VMEM and under v5e's 16 MiB scoped-VMEM default).
    vmem_cap_tb = max(128, ((2 << 20) // (4 * c_pad)) // 128 * 128)
    tb = min(_round_up(block_batch, 128), _round_up(batch, 128), vmem_cap_tb)
    b_pad = _round_up(batch, tb)
    grid = (b_pad // tb,)

    # P(u24 < thr) = thr / 2^24 = 1 - p (up to 2^-24 rounding).
    thr = int(round((1.0 - float(p)) * (1 << 24)))
    thr = max(0, min(thr, 1 << 24))

    if jax.default_backend() == "tpu":
        # On-chip hardware PRNG: no HBM tensor input is streamed at all.
        kernel = functools.partial(
            _prng_kernel, n_draws=n_draws, c_pad=c_pad, tb=tb, thr=thr)
        seed_arr = jnp.asarray([seed], dtype=jnp.int32)
        out = pl.pallas_call(
            kernel,
            out_shape=jax.ShapeDtypeStruct((1, b_pad), dtype),
            grid_spec=pltpu.PrefetchScalarGridSpec(
                num_scalar_prefetch=1,                 # seed lives in SMEM
                grid=grid,
                in_specs=[],
                out_specs=pl.BlockSpec((1, tb), lambda i, seed_ref: (0, i)),
            ),
            compiler_params=pltpu.CompilerParams(
                dimension_semantics=("parallel",),     # megacore sharding on v7x
            ),
        )(seed_arr)
    else:
        # TODO(synk): pltpu.prng_* has no lowering off-TPU (CPU interpret); fall
        # back to streaming jax.random bits through the same compare/reduce kernel.
        key = jax.random.PRNGKey(seed)
        bits = lax.bitcast_convert_type(
            jax.random.bits(key, (c_pad, b_pad), dtype=jnp.uint32), jnp.int32)
        kernel = functools.partial(_bits_kernel, n_draws=n_draws, thr=thr)
        out = pl.pallas_call(
            kernel,
            out_shape=jax.ShapeDtypeStruct((1, b_pad), dtype),
            grid=grid,
            in_specs=[pl.BlockSpec((c_pad, tb), lambda i: (0, i))],
            out_specs=pl.BlockSpec((1, tb), lambda i: (0, i)),
        )(bits)

    return out.reshape(b_pad)[:batch]


if __name__ == "__main__":
    key = jax.random.PRNGKey(0)
    batch, n, p = 8, 15, 0.3
    # x's values are unused (only batch size and dtype matter), as in PyTorch.
    x = jax.random.normal(key, (batch, 32), dtype=jnp.float32)

    nactive = jax.block_until_ready(binomial_count(x, n, p, seed=0))

    # Shape / dtype / value-range checks against the module's semantics.
    assert nactive.shape == (batch,)
    assert nactive.dtype == x.dtype
    assert bool(jnp.all(nactive == jnp.round(nactive)))          # integer counts
    assert bool(jnp.all((nactive >= 0) & (nactive <= n + 1)))    # in [0, n+1]

    # Deterministic in the seed.
    nactive2 = jax.block_until_ready(binomial_count(x, n, p, seed=0))
    assert bool(jnp.all(nactive == nactive2))

    # Statistical sanity check at a larger batch: E[count] = (n+1)*(1-p) = 11.2,
    # std of the sample mean over 4096 rows ~ 0.029, so 0.5 is a >15-sigma bound.
    xb = jnp.zeros((4096, 1), dtype=jnp.float32)
    counts = jax.block_until_ready(binomial_count(xb, n, p, seed=1))
    mean = float(jnp.mean(counts))
    expected = (n + 1) * (1.0 - p)
    assert abs(mean - expected) < 0.5, (mean, expected)

    print("KERNEL_OK")
</pallas_src>

<mosaic_0001>
module attributes {stable_mosaic.version = 11 : i64} {
  func.func @_bits_kernel(%arg0: i32, %arg1: memref<16x128xi32, #tpu.memory_space<vmem>>, %arg2: memref<1x128xf32, #tpu.memory_space<vmem>>) attributes {dimension_semantics = [#tpu.dimension_semantics<arbitrary>], iteration_bounds = array<i64: 1>, scalar_prefetch = 0 : i64, scratch_operands = 0 : i64, tpu.core_type = #tpu.core_type<tc>, window_params = [{transform_indices = @transform_0, window_bounds = array<i64: 16, 128>}, {transform_indices = @transform_1, window_bounds = array<i64: 1, 128>}]} {
    %c0 = arith.constant 0 : index
    %c0_0 = arith.constant 0 : index
    %0 = vector.load %arg1[%c0, %c0_0] : memref<16x128xi32, #tpu.memory_space<vmem>>, vector<16x128xi32>
    %c16777215_i32 = arith.constant 16777215 : i32
    %1 = vector.broadcast %c16777215_i32 : i32 to vector<16x128xi32>
    %2 = arith.andi %0, %1 : vector<16x128xi32>
    %3 = tpu.iota {dimensions = array<i32: 0>} : vector<16x1xi32>
    %c16_i32 = arith.constant 16 : i32
    %4 = vector.broadcast %c16_i32 : i32 to vector<16x1xi32>
    %5 = arith.cmpi slt, %3, %4 : vector<16x1xi32>
    %c11744051_i32 = arith.constant 11744051 : i32
    %c0_i32 = arith.constant 0 : i32
    %6 = vector.broadcast %c11744051_i32 : i32 to vector<16x1xi32>
    %7 = vector.broadcast %c0_i32 : i32 to vector<16x1xi32>
    %8 = arith.select %5, %6, %7 : vector<16x1xi1>, vector<16x1xi32>
    %9 = vector.broadcast %8 : vector<16x1xi32> to vector<16x128xi32>
    %10 = arith.cmpi slt, %2, %9 : vector<16x128xi32>
    %11 = arith.extui %10 : vector<16x128xi1> to vector<16x128xi32>
    %cst = arith.constant dense<0> : vector<128xi32>
    %12 = vector.multi_reduction <add>, %11, %cst [0] : vector<16x128xi32> to vector<128xi32>
    %13 = vector.shape_cast %12 : vector<128xi32> to vector<1x128xi32>
    %14 = arith.sitofp %13 : vector<1x128xi32> to vector<1x128xf32>
    %c0_1 = arith.constant 0 : index
    %c0_2 = arith.constant 0 : index
    %15 = vector.load %arg2[%c0_1, %c0_2] : memref<1x128xf32, #tpu.memory_space<vmem>>, vector<1x128xf32>
    tpu.vector_store %arg2[%c0_1, %c0_2], %14 {strides = array<i32>} : memref<1x128xf32, #tpu.memory_space<vmem>>, vector<1x128xf32>,
    return
  }
  func.func @transform_0(%arg0: i32) -> (i32, i32) {
    %c0_i32 = arith.constant 0 : i32
    %c0_i32_0 = arith.constant 0 : i32
    return %c0_i32, %arg0 : i32, i32
  }
  func.func @transform_1(%arg0: i32) -> (i32, i32) {
    %c0_i32 = arith.constant 0 : i32
    %c0_i32_0 = arith.constant 0 : i32
    return %c0_i32, %arg0 : i32, i32
  }
}

</mosaic_0001>

<llo_original>
// kernel: tpu_custom_call.1
$region0: #{tpu_custom_call.1}
  #allocation0 [shape = 'u32[]', space=smem, size = 0x4, offset = 0x4, fixed_abs, tag = 'smem constant byte address 0x4 - core index']
  #allocation1 [shape = 'u32[144,128]{1,0:T(1,128)}', space=vmem, size = 0x12000, scoped, tag = 'internal scratch']
  %s0 = inlined_call_operand.hbm [shape: s32[16,128], index: 0, kind: input, shape index: {}]
  %s1 = inlined_call_operand.hbm [shape: f32[1,128], index: 1, kind: output, shape index: {}]
  %s2 = sld [smem:[#allocation0]]
  $region18: #{tpu_custom_call.1} parent=0
    _
  %s4 = ssub.s32 1, %s2
  %s5 = scalar_select 0, %s4, %s2
  $region1: #{tpu_custom_call.1} parent=0
    #allocation2 [shape = 'u8[8192]{0}', space=vmem, size = 0x2000, scoped, tag = 'input window, operand 0, single buffered']
    #allocation3 [shape = 's32[1]{0}', space=sflag, size = 0x4, scoped, tag = 'scoped memory for tpu_custom_call.1']
    #allocation4 [shape = 's32[1]{0}', space=sflag, size = 0x4, scoped, tag = 'scoped memory for tpu_custom_call.1']
    #allocation5 [shape = 'u8[512]{0}', space=vmem, size = 0x400, scoped, tag = 'output window, operand 0, single buffered']
    %6 = vsyncpa [#allocation3], 0
    %7 = vsyncpa [#allocation4], 0
    // Predicated region
    $region2: #{tpu_custom_call.1} parent=1 // pred_check
      _
    $region3: #{tpu_custom_call.1} parent=1 // pred_check_branch
      %9 = sbr.rel (0) target = $region5
    $region4: #{tpu_custom_call.1} parent=1 // pred_region
      %s11 = ssub.s32 256, 256
      %12 = vsyncadd [#allocation3], %s11
      %s13 = sshll.u32 [#allocation2], 4
      %s14 = int_to_ptr.vmem [resolvable:$true] %s13
      %19 = dma.hbm_to_vmem [thread:$0]  %s0, 256, %s14, [#allocation3], 128, 128, 8
    $region5: #{tpu_custom_call.1} parent=1 // pred_fallthru
      _
    // Predicated region
    $region6: #{tpu_custom_call.1} parent=1 // pred_check
      _
    $region7: #{tpu_custom_call.1} parent=1 // pred_check_branch
      %21 = sbr.rel (0) target = $region9
    $region8: #{tpu_custom_call.1} parent=1 // pred_region
      %22 = dma.done [#allocation3], 256
    $region9: #{tpu_custom_call.1} parent=1 // pred_fallthru
      _
    %v23 = vld [vmem:[#allocation2] sm:$0xff]
    %v24 = vld [vmem:[#allocation2 + $0x8] sm:$0xff]
    %v25 = vand.u32 %v23, 16777215
    %v26 = vand.u32 %v24, 16777215
    %v27 = vlaneseq
    %v28 = vshrl.u32 %v27, 7
    %v29 = vadd.s32 %v28, 8
    %vm30 = vcmp.lt.s32.totalorder %v28, 16
    %vm31 = vcmp.lt.s32.totalorder %v29, 16
    %v32 = vsel %vm30, 11744051, 0
    %v33 = vsel %vm31, 11744051, 0
    %vm34 = vcmp.lt.s32.totalorder %v25, %v32
    %vm35 = vcmp.lt.s32.totalorder %v26, %v33
    %v36 = vsel %vm34, 1, 0
    %v37 = vsel %vm35, 1, 0
    %v38 = vadd.s32 %v36, %v37
    %v39 = vrot.slane %v38, 4
    %v40 = vadd.s32 %v38, %v39
    %v41 = vrot.slane %v40, 2
    %v42 = vadd.s32 %v40, %v41
    %v43 = vrot.slane %v42, 1
    %v44 = vadd.s32 %v42, %v43
    %v45 = vcvt.s32.f32 %v44
    %46 = vst [vmem:[#allocation5] sm:$0x1] %v45
    // Predicated region
    $region10: #{tpu_custom_call.1} parent=1 // pred_check
      _
    $region11: #{tpu_custom_call.1} parent=1 // pred_check_branch
      %48 = sbr.rel (0) target = $region13
    $region12: #{tpu_custom_call.1} parent=1 // pred_region
      %s50 = ssub.s32 16, 16
      %51 = vsyncadd [#allocation4], %s50
      %s53 = sshll.u32 [#allocation5], 4
      %s54 = int_to_ptr.vmem [resolvable:$true] %s53
      %56 = dma.vmem_to_hbm [thread:$0]  %s54, 16, %s1, [#allocation4]
    $region13: #{tpu_custom_call.1} parent=1 // pred_fallthru
      _
    // Predicated region
    $region14: #{tpu_custom_call.1} parent=1 // pred_check
      _
    $region15: #{tpu_custom_call.1} parent=1 // pred_check_branch
      %58 = sbr.rel (0) target = $region17
    $region16: #{tpu_custom_call.1} parent=1 // pred_region
      %59 = dma.done [#allocation4], 16
    $region17: #{tpu_custom_call.1} parent=1 // pred_fallthru
      _
    %60 = vsyncpa [#allocation3], 1
    %61 = vsyncpa [#allocation4], 1

</llo_original>
